<compile_context>
chip_gen: v6e
topology: v6e:2x2x1
jax: 0.10.0
libtpu: 0.0.40
codegen_flags: <defaults>
</compile_context>

<pallas_src>
import jax
import jax.numpy as jnp
from jax.experimental import pallas as pl
from jax.experimental.pallas import tpu as pltpu

NUM_INPUTS = 784          # logical K
NUM_OUTPUTS = 10          # logical N
K_PAD = 896               # 784 padded up to a multiple of 128 (lane-aligned K)
N_PAD = 128               # 10 padded up to 128 (lane-dense output)
TILE_B = 512              # rows per grid step (fits all generations with 2x buffering)


def _round_up(x: int, m: int) -> int:
    return ((x + m - 1) // m) * m


def linear_kernel(x_ref, w_ref, b_ref, o_ref):
    # x_ref: (TB, K_PAD)  w_ref: (K_PAD, N_PAD)  b_ref: (1, N_PAD)  o_ref: (TB, N_PAD)
    acc = jnp.dot(x_ref[...], w_ref[...], preferred_element_type=jnp.float32)
    o_ref[...] = (acc + b_ref[...]).astype(o_ref.dtype)


def linear_net_forward(x, w, b):
    """Forward pass of LinearNet.

    x: (B, C, H, W) float32 with C*H*W == 784
    w: (784, 10)    float32   (stored as (in_features, out_features))
    b: (10,)        float32
    returns: (B, 10) float32
    """
    batch = x.shape[0]
    x2d = x.reshape(batch, -1)                      # glue: x.view(x.shape[0], -1)

    # --- pad to TPU-friendly shapes (zero padding preserves the matmul) ---
    b8 = _round_up(batch, 8)                        # sublane alignment
    tb = min(TILE_B, b8)                            # tile rows
    b_pad = _round_up(b8, tb)                       # total padded batch

    x_pad = jnp.pad(x2d, ((0, b_pad - batch), (0, K_PAD - NUM_INPUTS)))
    w_pad = jnp.pad(w, ((0, K_PAD - NUM_INPUTS), (0, N_PAD - NUM_OUTPUTS)))
    b_pad2d = jnp.pad(b.reshape(1, NUM_OUTPUTS), ((0, 0), (0, N_PAD - NUM_OUTPUTS)))

    grid_b = b_pad // tb

    cost = pl.CostEstimate(
        flops=2 * b_pad * K_PAD * N_PAD,
        transcendentals=0,
        bytes_accessed=(b_pad * K_PAD + K_PAD * N_PAD + b_pad * N_PAD) * 4,
    )

    out = pl.pallas_call(
        linear_kernel,
        out_shape=jax.ShapeDtypeStruct((b_pad, N_PAD), jnp.float32),
        grid_spec=pltpu.PrefetchScalarGridSpec(
            num_scalar_prefetch=0,
            grid=(grid_b,),
            in_specs=[
                pl.BlockSpec((tb, K_PAD), lambda i: (i, 0)),       # streamed x tiles
                pl.BlockSpec((K_PAD, N_PAD), lambda i: (0, 0)),    # resident weights
                pl.BlockSpec((1, N_PAD), lambda i: (0, 0)),        # resident bias
            ],
            out_specs=pl.BlockSpec((tb, N_PAD), lambda i: (i, 0)),
        ),
        compiler_params=pltpu.CompilerParams(
            dimension_semantics=("parallel",),   # megacore sharding on v7x
        ),
        cost_estimate=cost,
    )(x_pad, w_pad, b_pad2d)

    # Strip batch / lane padding.
    return out[:batch, :NUM_OUTPUTS]


if __name__ == "__main__":
    key = jax.random.PRNGKey(0)
    kx, kw, kb, kx2 = jax.random.split(key, 4)

    # Deterministic parameter init (mimics nn.Linear's uniform(-1/sqrt(in), 1/sqrt(in)))
    bound = 1.0 / (NUM_INPUTS ** 0.5)
    w = jax.random.uniform(kw, (NUM_INPUTS, NUM_OUTPUTS), jnp.float32, -bound, bound)
    b = jax.random.uniform(kb, (NUM_OUTPUTS,), jnp.float32, -bound, bound)

    # Small example input consistent with the forward: (B, 1, 28, 28) -> flattened 784
    x = jax.random.normal(kx, (8, 1, 28, 28), jnp.float32)
    y = linear_net_forward(x, w, b)
    jax.block_until_ready(y)
    y_ref = x.reshape(x.shape[0], -1) @ w + b
    assert y.shape == (8, NUM_OUTPUTS)
    assert jnp.allclose(y, y_ref, atol=1e-4, rtol=1e-4)

    # Exercise the multi-tile path (batch > TILE_B, non-multiple batch).
    x_big = jax.random.normal(kx2, (600, 1, 28, 28), jnp.float32)
    y_big = linear_net_forward(x_big, w, b)
    jax.block_until_ready(y_big)
    y_big_ref = x_big.reshape(x_big.shape[0], -1) @ w + b
    assert y_big.shape == (600, NUM_OUTPUTS)
    assert jnp.allclose(y_big, y_big_ref, atol=1e-4, rtol=1e-4)

    print("KERNEL_OK")
</pallas_src>

<mosaic_0001>
module attributes {stable_mosaic.version = 11 : i64} {
  func.func @linear_kernel(%arg0: i32, %arg1: memref<8x896xf32, #tpu.memory_space<vmem>>, %arg2: memref<896x128xf32, #tpu.memory_space<vmem>>, %arg3: memref<1x128xf32, #tpu.memory_space<vmem>>, %arg4: memref<8x128xf32, #tpu.memory_space<vmem>>) attributes {dimension_semantics = [#tpu.dimension_semantics<parallel>], iteration_bounds = array<i64: 1>, scalar_prefetch = 0 : i64, scratch_operands = 0 : i64, tpu.core_type = #tpu.core_type<tc>, window_params = [{transform_indices = @transform_0, window_bounds = array<i64: 8, 896>}, {pipeline_mode = #tpu.pipeline_mode<synchronous>, transform_indices = @transform_1, window_bounds = array<i64: 896, 128>}, {pipeline_mode = #tpu.pipeline_mode<synchronous>, transform_indices = @transform_2, window_bounds = array<i64: 1, 128>}, {transform_indices = @transform_3, window_bounds = array<i64: 8, 128>}]} {
    %c0 = arith.constant 0 : index
    %c0_0 = arith.constant 0 : index
    %0 = vector.load %arg1[%c0, %c0_0] : memref<8x896xf32, #tpu.memory_space<vmem>>, vector<8x896xf32>
    %c0_1 = arith.constant 0 : index
    %c0_2 = arith.constant 0 : index
    %1 = vector.load %arg2[%c0_1, %c0_2] : memref<896x128xf32, #tpu.memory_space<vmem>>, vector<896x128xf32>
    %cst = arith.constant dense<0.000000e+00> : vector<8x128xf32>
    %2 = tpu.matmul %0, %1, %cst {dimension_numbers = #tpu.dot_dimension_numbers<[1], [0], [0], [1], [0, 0, 1, 1], [], []>} : vector<8x896xf32>, vector<896x128xf32>, vector<8x128xf32> -> vector<8x128xf32>
    %c0_3 = arith.constant 0 : index
    %c0_4 = arith.constant 0 : index
    %3 = vector.load %arg3[%c0_3, %c0_4] : memref<1x128xf32, #tpu.memory_space<vmem>>, vector<1x128xf32>
    %4 = vector.broadcast %3 : vector<1x128xf32> to vector<8x128xf32>
    %5 = arith.addf %2, %4 : vector<8x128xf32>
    %c0_5 = arith.constant 0 : index
    %c0_6 = arith.constant 0 : index
    %6 = vector.load %arg4[%c0_5, %c0_6] : memref<8x128xf32, #tpu.memory_space<vmem>>, vector<8x128xf32>
    tpu.vector_store %arg4[%c0_5, %c0_6], %5 {strides = array<i32>} : memref<8x128xf32, #tpu.memory_space<vmem>>, vector<8x128xf32>,
    return
  }
  func.func @transform_0(%arg0: i32) -> (i32, i32) {
    %c0_i32 = arith.constant 0 : i32
    %c0_i32_0 = arith.constant 0 : i32
    return %arg0, %c0_i32 : i32, i32
  }
  func.func @transform_1(%arg0: i32) -> (i32, i32) {
    %c0_i32 = arith.constant 0 : i32
    %c0_i32_0 = arith.constant 0 : i32
    %c0_i32_1 = arith.constant 0 : i32
    return %c0_i32, %c0_i32_0 : i32, i32
  }
  func.func @transform_2(%arg0: i32) -> (i32, i32) {
    %c0_i32 = arith.constant 0 : i32
    %c0_i32_0 = arith.constant 0 : i32
    %c0_i32_1 = arith.constant 0 : i32
    return %c0_i32, %c0_i32_0 : i32, i32
  }
  func.func @transform_3(%arg0: i32) -> (i32, i32) {
    %c0_i32 = arith.constant 0 : i32
    %c0_i32_0 = arith.constant 0 : i32
    return %arg0, %c0_i32 : i32, i32
  }
}

</mosaic_0001>

<llo_original>
// kernel: tpu_custom_call.1
$region0: #{tpu_custom_call.1}
  #allocation0 [shape = 'u32[]', space=smem, size = 0x4, offset = 0x4, fixed_abs, tag = 'smem constant byte address 0x4 - core index']
  #allocation1 [shape = 'u32[144,128]{1,0:T(1,128)}', space=vmem, size = 0x12000, scoped, tag = 'internal scratch']
  %s0 = inlined_call_operand.hbm [shape: f32[8,896], index: 0, kind: input, shape index: {}]
  %s1 = inlined_call_operand.hbm [shape: f32[896,128], index: 1, kind: input, shape index: {}]
  %s2 = inlined_call_operand.vmem [shape: f32[1,128], index: 2, kind: input, shape index: {}]
  %s3 = inlined_call_operand.hbm [shape: f32[8,128], index: 3, kind: output, shape index: {}]
  %s4 = sld [smem:[#allocation0]]
  $region30: #{tpu_custom_call.1} parent=0
    _
  %s6 = ssub.s32 1, %s4
  %s7 = scalar_select 0, %s6, %s4
  $region1: #{tpu_custom_call.1} parent=0
    #allocation2 [shape = 'u8[28672]{0}', space=vmem, size = 0x7000, scoped, tag = 'input window, operand 0, single buffered']
    #allocation3 [shape = 's32[1]{0}', space=sflag, size = 0x4, scoped, tag = 'scoped memory for tpu_custom_call.1']
    #allocation4 [shape = 's32[1]{0}', space=sflag, size = 0x4, scoped, tag = 'scoped memory for tpu_custom_call.1']
    #allocation5 [shape = 'u8[458752]{0}', space=vmem, size = 0x70000, scoped, tag = 'input window, operand 1, single buffered']
    #allocation6 [shape = 's32[1]{0}', space=sflag, size = 0x4, scoped, tag = 'scoped memory for tpu_custom_call.1']
    #allocation7 [shape = 'u8[4096]{0}', space=vmem, size = 0x1000, scoped, tag = 'output window, operand 0, single buffered']
    %8 = vsyncpa [#allocation3], 0
    %9 = vsyncpa [#allocation6], 0
    %10 = vsyncpa [#allocation4], 0
    // Predicated region
    $region2: #{tpu_custom_call.1} parent=1 // pred_check
      _
    $region3: #{tpu_custom_call.1} parent=1 // pred_check_branch
      %12 = sbr.rel (0) target = $region5
    $region4: #{tpu_custom_call.1} parent=1 // pred_region
      %s14 = ssub.s32 896, 896
      %15 = vsyncadd [#allocation3], %s14
      %s17 = sshll.u32 [#allocation2], 4
      %s18 = int_to_ptr.vmem [resolvable:$true] %s17
      %20 = dma.hbm_to_vmem [thread:$0]  %s0, 896, %s18, [#allocation3]
    $region5: #{tpu_custom_call.1} parent=1 // pred_fallthru
      _
    // Predicated region
    $region6: #{tpu_custom_call.1} parent=1 // pred_check
      _
    $region7: #{tpu_custom_call.1} parent=1 // pred_check_branch
      %22 = sbr.rel (0) target = $region9
    $region8: #{tpu_custom_call.1} parent=1 // pred_region
      %s24 = ssub.s32 14336, 14336
      %25 = vsyncadd [#allocation6], %s24
      %s26 = sshll.u32 [#allocation5], 4
      %s27 = int_to_ptr.vmem [resolvable:$true] %s26
      %32 = dma.hbm_to_vmem [thread:$0]  %s1, 14336, %s27, [#allocation6], 128, 128, 8
    $region9: #{tpu_custom_call.1} parent=1 // pred_fallthru
      _
    // Predicated region
    $region10: #{tpu_custom_call.1} parent=1 // pred_check
      _
    $region11: #{tpu_custom_call.1} parent=1 // pred_check_branch
      %34 = sbr.rel (0) target = $region13
    $region12: #{tpu_custom_call.1} parent=1 // pred_region
      _
    $region13: #{tpu_custom_call.1} parent=1 // pred_fallthru
      _
    // Predicated region
    $region14: #{tpu_custom_call.1} parent=1 // pred_check
      _
    $region15: #{tpu_custom_call.1} parent=1 // pred_check_branch
      %36 = sbr.rel (0) target = $region17
    $region16: #{tpu_custom_call.1} parent=1 // pred_region
      %37 = dma.done [#allocation3], 896
    $region17: #{tpu_custom_call.1} parent=1 // pred_fallthru
      _
    // Predicated region
    $region18: #{tpu_custom_call.1} parent=1 // pred_check
      _
    $region19: #{tpu_custom_call.1} parent=1 // pred_check_branch
      %39 = sbr.rel (0) target = $region21
    $region20: #{tpu_custom_call.1} parent=1 // pred_region
      %40 = dma.done [#allocation6], 14336
    $region21: #{tpu_custom_call.1} parent=1 // pred_fallthru
      _
    %v41 = vld [vmem:[#allocation2] sm:$0xff]
    %v42 = vld [vmem:[#allocation2 + $0x8] sm:$0xff]
    %v43 = vld [vmem:[#allocation2 + $0x10] sm:$0xff]
    %v44 = vld [vmem:[#allocation2 + $0x18] sm:$0xff]
    %v45 = vld [vmem:[#allocation2 + $0x20] sm:$0xff]
    %v46 = vld [vmem:[#allocation2 + $0x28] sm:$0xff]
    %v47 = vld [vmem:[#allocation2 + $0x30] sm:$0xff]
    %v48 = vld [vmem:[#allocation5] sm:$0xff]
    %v49 = vld [vmem:[#allocation5 + $0x8] sm:$0xff]
    %v50 = vld [vmem:[#allocation5 + $0x10] sm:$0xff]
    %v51 = vld [vmem:[#allocation5 + $0x18] sm:$0xff]
    %v52 = vld [vmem:[#allocation5 + $0x20] sm:$0xff]
    %v53 = vld [vmem:[#allocation5 + $0x28] sm:$0xff]
    %v54 = vld [vmem:[#allocation5 + $0x30] sm:$0xff]
    %v55 = vld [vmem:[#allocation5 + $0x38] sm:$0xff]
    %v56 = vld [vmem:[#allocation5 + $0x40] sm:$0xff]
    %v57 = vld [vmem:[#allocation5 + $0x48] sm:$0xff]
    %v58 = vld [vmem:[#allocation5 + $0x50] sm:$0xff]
    %v59 = vld [vmem:[#allocation5 + $0x58] sm:$0xff]
    %v60 = vld [vmem:[#allocation5 + $0x60] sm:$0xff]
    %v61 = vld [vmem:[#allocation5 + $0x68] sm:$0xff]
    %v62 = vld [vmem:[#allocation5 + $0x70] sm:$0xff]
    %v63 = vld [vmem:[#allocation5 + $0x78] sm:$0xff]
    %v64 = vld [vmem:[#allocation5 + $0x80] sm:$0xff]
    %v65 = vld [vmem:[#allocation5 + $0x88] sm:$0xff]
    %v66 = vld [vmem:[#allocation5 + $0x90] sm:$0xff]
    %v67 = vld [vmem:[#allocation5 + $0x98] sm:$0xff]
    %v68 = vld [vmem:[#allocation5 + $0xa0] sm:$0xff]
    %v69 = vld [vmem:[#allocation5 + $0xa8] sm:$0xff]
    %v70 = vld [vmem:[#allocation5 + $0xb0] sm:$0xff]
    %v71 = vld [vmem:[#allocation5 + $0xb8] sm:$0xff]
    %v72 = vld [vmem:[#allocation5 + $0xc0] sm:$0xff]
    %v73 = vld [vmem:[#allocation5 + $0xc8] sm:$0xff]
    %v74 = vld [vmem:[#allocation5 + $0xd0] sm:$0xff]
    %v75 = vld [vmem:[#allocation5 + $0xd8] sm:$0xff]
    %v76 = vld [vmem:[#allocation5 + $0xe0] sm:$0xff]
    %v77 = vld [vmem:[#allocation5 + $0xe8] sm:$0xff]
    %v78 = vld [vmem:[#allocation5 + $0xf0] sm:$0xff]
    %v79 = vld [vmem:[#allocation5 + $0xf8] sm:$0xff]
    %v80 = vld [vmem:[#allocation5 + $0x100] sm:$0xff]
    %v81 = vld [vmem:[#allocation5 + $0x108] sm:$0xff]
    %v82 = vld [vmem:[#allocation5 + $0x110] sm:$0xff]
    %v83 = vld [vmem:[#allocation5 + $0x118] sm:$0xff]
    %v84 = vld [vmem:[#allocation5 + $0x120] sm:$0xff]
    %v85 = vld [vmem:[#allocation5 + $0x128] sm:$0xff]
    %v86 = vld [vmem:[#allocation5 + $0x130] sm:$0xff]
    %v87 = vld [vmem:[#allocation5 + $0x138] sm:$0xff]
    %v88 = vld [vmem:[#allocation5 + $0x140] sm:$0xff]
    %v89 = vld [vmem:[#allocation5 + $0x148] sm:$0xff]
    %v90 = vld [vmem:[#allocation5 + $0x150] sm:$0xff]
    %v91 = vld [vmem:[#allocation5 + $0x158] sm:$0xff]
    %v92 = vld [vmem:[#allocation5 + $0x160] sm:$0xff]
    %v93 = vld [vmem:[#allocation5 + $0x168] sm:$0xff]
    %v94 = vld [vmem:[#allocation5 + $0x170] sm:$0xff]
    %v95 = vld [vmem:[#allocation5 + $0x178] sm:$0xff]
    %v96 = vld [vmem:[#allocation5 + $0x180] sm:$0xff]
    %v97 = vld [vmem:[#allocation5 + $0x188] sm:$0xff]
    %v98 = vld [vmem:[#allocation5 + $0x190] sm:$0xff]
    %v99 = vld [vmem:[#allocation5 + $0x198] sm:$0xff]
    %v100 = vld [vmem:[#allocation5 + $0x1a0] sm:$0xff]
    %v101 = vld [vmem:[#allocation5 + $0x1a8] sm:$0xff]
    %v102 = vld [vmem:[#allocation5 + $0x1b0] sm:$0xff]
    %v103 = vld [vmem:[#allocation5 + $0x1b8] sm:$0xff]
    %v104 = vld [vmem:[#allocation5 + $0x1c0] sm:$0xff]
    %v105 = vld [vmem:[#allocation5 + $0x1c8] sm:$0xff]
    %v106 = vld [vmem:[#allocation5 + $0x1d0] sm:$0xff]
    %v107 = vld [vmem:[#allocation5 + $0x1d8] sm:$0xff]
    %v108 = vld [vmem:[#allocation5 + $0x1e0] sm:$0xff]
    %v109 = vld [vmem:[#allocation5 + $0x1e8] sm:$0xff]
    %v110 = vld [vmem:[#allocation5 + $0x1f0] sm:$0xff]
    %v111 = vld [vmem:[#allocation5 + $0x1f8] sm:$0xff]
    %v112 = vld [vmem:[#allocation5 + $0x200] sm:$0xff]
    %v113 = vld [vmem:[#allocation5 + $0x208] sm:$0xff]
    %v114 = vld [vmem:[#allocation5 + $0x210] sm:$0xff]
    %v115 = vld [vmem:[#allocation5 + $0x218] sm:$0xff]
    %v116 = vld [vmem:[#allocation5 + $0x220] sm:$0xff]
    %v117 = vld [vmem:[#allocation5 + $0x228] sm:$0xff]
    %v118 = vld [vmem:[#allocation5 + $0x230] sm:$0xff]
    %v119 = vld [vmem:[#allocation5 + $0x238] sm:$0xff]
    %v120 = vld [vmem:[#allocation5 + $0x240] sm:$0xff]
    %v121 = vld [vmem:[#allocation5 + $0x248] sm:$0xff]
    %v122 = vld [vmem:[#allocation5 + $0x250] sm:$0xff]
    %v123 = vld [vmem:[#allocation5 + $0x258] sm:$0xff]
    %v124 = vld [vmem:[#allocation5 + $0x260] sm:$0xff]
    %v125 = vld [vmem:[#allocation5 + $0x268] sm:$0xff]
    %v126 = vld [vmem:[#allocation5 + $0x270] sm:$0xff]
    %v127 = vld [vmem:[#allocation5 + $0x278] sm:$0xff]
    %v128 = vld [vmem:[#allocation5 + $0x280] sm:$0xff]
    %v129 = vld [vmem:[#allocation5 + $0x288] sm:$0xff]
    %v130 = vld [vmem:[#allocation5 + $0x290] sm:$0xff]
    %v131 = vld [vmem:[#allocation5 + $0x298] sm:$0xff]
    %v132 = vld [vmem:[#allocation5 + $0x2a0] sm:$0xff]
    %v133 = vld [vmem:[#allocation5 + $0x2a8] sm:$0xff]
    %v134 = vld [vmem:[#allocation5 + $0x2b0] sm:$0xff]
    %v135 = vld [vmem:[#allocation5 + $0x2b8] sm:$0xff]
    %v136 = vld [vmem:[#allocation5 + $0x2c0] sm:$0xff]
    %v137 = vld [vmem:[#allocation5 + $0x2c8] sm:$0xff]
    %v138 = vld [vmem:[#allocation5 + $0x2d0] sm:$0xff]
    %v139 = vld [vmem:[#allocation5 + $0x2d8] sm:$0xff]
    %v140 = vld [vmem:[#allocation5 + $0x2e0] sm:$0xff]
    %v141 = vld [vmem:[#allocation5 + $0x2e8] sm:$0xff]
    %v142 = vld [vmem:[#allocation5 + $0x2f0] sm:$0xff]
    %v143 = vld [vmem:[#allocation5 + $0x2f8] sm:$0xff]
    %v144 = vld [vmem:[#allocation5 + $0x300] sm:$0xff]
    %v145 = vld [vmem:[#allocation5 + $0x308] sm:$0xff]
    %v146 = vld [vmem:[#allocation5 + $0x310] sm:$0xff]
    %v147 = vld [vmem:[#allocation5 + $0x318] sm:$0xff]
    %v148 = vld [vmem:[#allocation5 + $0x320] sm:$0xff]
    %v149 = vld [vmem:[#allocation5 + $0x328] sm:$0xff]
    %v150 = vld [vmem:[#allocation5 + $0x330] sm:$0xff]
    %v151 = vld [vmem:[#allocation5 + $0x338] sm:$0xff]
    %v152 = vld [vmem:[#allocation5 + $0x340] sm:$0xff]
    %v153 = vld [vmem:[#allocation5 + $0x348] sm:$0xff]
    %v154 = vld [vmem:[#allocation5 + $0x350] sm:$0xff]
    %v155 = vld [vmem:[#allocation5 + $0x358] sm:$0xff]
    %v156 = vld [vmem:[#allocation5 + $0x360] sm:$0xff]
    %v157 = vld [vmem:[#allocation5 + $0x368] sm:$0xff]
    %v158 = vld [vmem:[#allocation5 + $0x370] sm:$0xff]
    %v159 = vld [vmem:[#allocation5 + $0x378] sm:$0xff]
    %v160 = vld [vmem:[%s2] sm:$0x1]
    %v162 = vlaneseq
    %v163 = vshrl.u32 %v162, 7
    %v164 = vsub.s32 0, %v163
    %v165 = vrot.slane %v160, %v164
    %167 = vmatprep.subr.mxu0 0.0
    %168 = vmatpush1.msra.mxu0 %v63
    %169 = vmatprep.subr.mxu0 0.0
    %170 = vmatpush1.msra.mxu0 %v62
    %171 = vmatprep.subr.mxu0 0.0
    %172 = vmatpush1.msra.mxu0 %v61
    %173 = vmatprep.subr.mxu0 0.0
    %174 = vmatpush1.msra.mxu0 %v60
    %175 = vmatprep.subr.mxu0 0.0
    %176 = vmatpush1.msra.mxu0 %v59
    %177 = vmatprep.subr.mxu0 0.0
    %178 = vmatpush1.msra.mxu0 %v58
    %179 = vmatprep.subr.mxu0 0.0
    %180 = vmatpush1.msra.mxu0 %v57
    %181 = vmatprep.subr.mxu0 0.0
    %182 = vmatpush1.msra.mxu0 %v56
    %183 = vmatprep.subr.mxu0 0.0
    %184 = vmatpush1.msra.mxu0 %v55
    %185 = vmatprep.subr.mxu0 0.0
    %186 = vmatpush1.msra.mxu0 %v54
    %187 = vmatprep.subr.mxu0 0.0
    %188 = vmatpush1.msra.mxu0 %v53
    %189 = vmatprep.subr.mxu0 0.0
    %190 = vmatpush1.msra.mxu0 %v52
    %191 = vmatprep.subr.mxu0 0.0
    %192 = vmatpush1.msra.mxu0 %v51
    %193 = vmatprep.subr.mxu0 0.0
    %194 = vmatpush1.msra.mxu0 %v50
    %195 = vmatprep.subr.mxu0 0.0
    %196 = vmatpush1.msra.mxu0 %v49
    %197 = vmatprep.subr.mxu0 0.0
    %198 = vmatpush1.msra.mxu0 %v48
    %199 = vmatprep.subr.mxu0 0.0
    %200 = vmatpush2.msra.mxu0 %v79
    %201 = vmatprep.subr.mxu0 0.0
    %202 = vmatpush2.msra.mxu0 %v78
    %203 = vmatprep.subr.mxu0 0.0
    %204 = vmatpush2.msra.mxu0 %v77
    %205 = vmatprep.subr.mxu0 0.0
    %206 = vmatpush2.msra.mxu0 %v76
    %207 = vmatprep.subr.mxu0 0.0
    %208 = vmatpush2.msra.mxu0 %v75
    %209 = vmatprep.subr.mxu0 0.0
    %210 = vmatpush2.msra.mxu0 %v74
    %211 = vmatprep.subr.mxu0 0.0
    %212 = vmatpush2.msra.mxu0 %v73
    %213 = vmatprep.subr.mxu0 0.0
    %214 = vmatpush2.msra.mxu0 %v72
    %215 = vmatprep.subr.mxu0 0.0
    %216 = vmatpush2.msra.mxu0 %v71
    %217 = vmatprep.subr.mxu0 0.0
    %218 = vmatpush2.msra.mxu0 %v70
    %219 = vmatprep.subr.mxu0 0.0
    %220 = vmatpush2.msra.mxu0 %v69
    %221 = vmatprep.subr.mxu0 0.0
    %222 = vmatpush2.msra.mxu0 %v68
    %223 = vmatprep.subr.mxu0 0.0
    %224 = vmatpush2.msra.mxu0 %v67
    %225 = vmatprep.subr.mxu0 0.0
    %226 = vmatpush2.msra.mxu0 %v66
    %227 = vmatprep.subr.mxu0 0.0
    %228 = vmatpush2.msra.mxu0 %v65
    %229 = vmatprep.subr.mxu0 0.0
    %230 = vmatpush2.msra.mxu0 %v64
    %231 = vmatprep.mubr.f32.mxu0 %v42
    %232 = vmatmul.mubr.f32.gmra.mxu0 %v41
    %v233 = vpop.f32.mrf.mxu0
    %v234 = vadd.f32 %v165, %v233
    %v235 = vpop.f32.mrf.mxu0
    %236 = vdwg.mxu0
    %237 = vmatprep.subr.mxu0 0.0
    %238 = vmatpush1.msra.mxu0 %v95
    %239 = vmatprep.subr.mxu0 0.0
    %240 = vmatpush1.msra.mxu0 %v94
    %241 = vmatprep.subr.mxu0 0.0
    %242 = vmatpush1.msra.mxu0 %v93
    %243 = vmatprep.subr.mxu0 0.0
    %244 = vmatpush1.msra.mxu0 %v92
    %245 = vmatprep.subr.mxu0 0.0
    %246 = vmatpush1.msra.mxu0 %v91
    %247 = vmatprep.subr.mxu0 0.0
    %248 = vmatpush1.msra.mxu0 %v90
    %249 = vmatprep.subr.mxu0 0.0
    %250 = vmatpush1.msra.mxu0 %v89
    %251 = vmatprep.subr.mxu0 0.0
    %252 = vmatpush1.msra.mxu0 %v88
    %253 = vmatprep.subr.mxu0 0.0
    %254 = vmatpush1.msra.mxu0 %v87
    %255 = vmatprep.subr.mxu0 0.0
    %256 = vmatpush1.msra.mxu0 %v86
    %257 = vmatprep.subr.mxu0 0.0
    %258 = vmatpush1.msra.mxu0 %v85
    %259 = vmatprep.subr.mxu0 0.0
    %260 = vmatpush1.msra.mxu0 %v84
    %261 = vmatprep.subr.mxu0 0.0
    %262 = vmatpush1.msra.mxu0 %v83
    %263 = vmatprep.subr.mxu0 0.0
    %264 = vmatpush1.msra.mxu0 %v82
    %265 = vmatprep.subr.mxu0 0.0
    %266 = vmatpush1.msra.mxu0 %v81
    %267 = vmatprep.subr.mxu0 0.0
    %268 = vmatpush1.msra.mxu0 %v80
    %269 = vmatprep.subr.mxu0 0.0
    %270 = vmatpush2.msra.mxu0 %v111
    %271 = vmatprep.subr.mxu0 0.0
    %272 = vmatpush2.msra.mxu0 %v110
    %273 = vmatprep.subr.mxu0 0.0
    %274 = vmatpush2.msra.mxu0 %v109
    %275 = vmatprep.subr.mxu0 0.0
    %276 = vmatpush2.msra.mxu0 %v108
    %277 = vmatprep.subr.mxu0 0.0
    %278 = vmatpush2.msra.mxu0 %v107
    %279 = vmatprep.subr.mxu0 0.0
    %280 = vmatpush2.msra.mxu0 %v106
    %281 = vmatprep.subr.mxu0 0.0
    %282 = vmatpush2.msra.mxu0 %v105
    %283 = vmatprep.subr.mxu0 0.0
    %284 = vmatpush2.msra.mxu0 %v104
    %285 = vmatprep.subr.mxu0 0.0
    %286 = vmatpush2.msra.mxu0 %v103
    %287 = vmatprep.subr.mxu0 0.0
    %288 = vmatpush2.msra.mxu0 %v102
    %289 = vmatprep.subr.mxu0 0.0
    %290 = vmatpush2.msra.mxu0 %v101
    %291 = vmatprep.subr.mxu0 0.0
    %292 = vmatpush2.msra.mxu0 %v100
    %293 = vmatprep.subr.mxu0 0.0
    %294 = vmatpush2.msra.mxu0 %v99
    %295 = vmatprep.subr.mxu0 0.0
    %296 = vmatpush2.msra.mxu0 %v98
    %297 = vmatprep.subr.mxu0 0.0
    %298 = vmatpush2.msra.mxu0 %v97
    %299 = vmatprep.subr.mxu0 0.0
    %300 = vmatpush2.msra.mxu0 %v96
    %301 = vmatprep.mubr.f32.mxu0 %v44
    %302 = vmatmul.mubr.f32.gmra.mxu0 %v43
    %v303 = vpop.f32.mrf.mxu0
    %v304 = vadd.f32 %v234, %v303
    %v305 = vpop.f32.mrf.mxu0
    %306 = vdwg.mxu0
    %307 = vmatprep.subr.mxu0 0.0
    %308 = vmatpush1.msra.mxu0 %v127
    %309 = vmatprep.subr.mxu0 0.0
    %310 = vmatpush1.msra.mxu0 %v126
    %311 = vmatprep.subr.mxu0 0.0
    %312 = vmatpush1.msra.mxu0 %v125
    %313 = vmatprep.subr.mxu0 0.0
    %314 = vmatpush1.msra.mxu0 %v124
    %315 = vmatprep.subr.mxu0 0.0
    %316 = vmatpush1.msra.mxu0 %v123
    %317 = vmatprep.subr.mxu0 0.0
    %318 = vmatpush1.msra.mxu0 %v122
    %319 = vmatprep.subr.mxu0 0.0
    %320 = vmatpush1.msra.mxu0 %v121
    %321 = vmatprep.subr.mxu0 0.0
    %322 = vmatpush1.msra.mxu0 %v120
    %323 = vmatprep.subr.mxu0 0.0
    %324 = vmatpush1.msra.mxu0 %v119
    %325 = vmatprep.subr.mxu0 0.0
    %326 = vmatpush1.msra.mxu0 %v118
    %327 = vmatprep.subr.mxu0 0.0
    %328 = vmatpush1.msra.mxu0 %v117
    %329 = vmatprep.subr.mxu0 0.0
    %330 = vmatpush1.msra.mxu0 %v116
    %331 = vmatprep.subr.mxu0 0.0
    %332 = vmatpush1.msra.mxu0 %v115
    %333 = vmatprep.subr.mxu0 0.0
    %334 = vmatpush1.msra.mxu0 %v114
    %335 = vmatprep.subr.mxu0 0.0
    %336 = vmatpush1.msra.mxu0 %v113
    %337 = vmatprep.subr.mxu0 0.0
    %338 = vmatpush1.msra.mxu0 %v112
    %339 = vmatprep.subr.mxu0 0.0
    %340 = vmatpush2.msra.mxu0 %v143
    %341 = vmatprep.subr.mxu0 0.0
    %342 = vmatpush2.msra.mxu0 %v142
    %343 = vmatprep.subr.mxu0 0.0
    %344 = vmatpush2.msra.mxu0 %v141
    %345 = vmatprep.subr.mxu0 0.0
    %346 = vmatpush2.msra.mxu0 %v140
    %347 = vmatprep.subr.mxu0 0.0
    %348 = vmatpush2.msra.mxu0 %v139
    %349 = vmatprep.subr.mxu0 0.0
    %350 = vmatpush2.msra.mxu0 %v138
    %351 = vmatprep.subr.mxu0 0.0
    %352 = vmatpush2.msra.mxu0 %v137
    %353 = vmatprep.subr.mxu0 0.0
    %354 = vmatpush2.msra.mxu0 %v136
    %355 = vmatprep.subr.mxu0 0.0
    %356 = vmatpush2.msra.mxu0 %v135
    %357 = vmatprep.subr.mxu0 0.0
    %358 = vmatpush2.msra.mxu0 %v134
    %359 = vmatprep.subr.mxu0 0.0
    %360 = vmatpush2.msra.mxu0 %v133
    %361 = vmatprep.subr.mxu0 0.0
    %362 = vmatpush2.msra.mxu0 %v132
    %363 = vmatprep.subr.mxu0 0.0
    %364 = vmatpush2.msra.mxu0 %v131
    %365 = vmatprep.subr.mxu0 0.0
    %366 = vmatpush2.msra.mxu0 %v130
    %367 = vmatprep.subr.mxu0 0.0
    %368 = vmatpush2.msra.mxu0 %v129
    %369 = vmatprep.subr.mxu0 0.0
    %370 = vmatpush2.msra.mxu0 %v128
    %371 = vmatprep.mubr.f32.mxu0 %v46
    %372 = vmatmul.mubr.f32.gmra.mxu0 %v45
    %v373 = vpop.f32.mrf.mxu0
    %v374 = vadd.f32 %v304, %v373
    %v375 = vpop.f32.mrf.mxu0
    %376 = vdwg.mxu0
    %377 = vmatprep.subr.mxu0 0.0
    %378 = vmatpush1.msra.mxu0 %v159
    %379 = vmatprep.subr.mxu0 0.0
    %380 = vmatpush1.msra.mxu0 %v158
    %381 = vmatprep.subr.mxu0 0.0
    %382 = vmatpush1.msra.mxu0 %v157
    %383 = vmatprep.subr.mxu0 0.0
    %384 = vmatpush1.msra.mxu0 %v156
    %385 = vmatprep.subr.mxu0 0.0
    %386 = vmatpush1.msra.mxu0 %v155
    %387 = vmatprep.subr.mxu0 0.0
    %388 = vmatpush1.msra.mxu0 %v154
    %389 = vmatprep.subr.mxu0 0.0
    %390 = vmatpush1.msra.mxu0 %v153
    %391 = vmatprep.subr.mxu0 0.0
    %392 = vmatpush1.msra.mxu0 %v152
    %393 = vmatprep.subr.mxu0 0.0
    %394 = vmatpush1.msra.mxu0 %v151
    %395 = vmatprep.subr.mxu0 0.0
    %396 = vmatpush1.msra.mxu0 %v150
    %397 = vmatprep.subr.mxu0 0.0
    %398 = vmatpush1.msra.mxu0 %v149
    %399 = vmatprep.subr.mxu0 0.0
    %400 = vmatpush1.msra.mxu0 %v148
    %401 = vmatprep.subr.mxu0 0.0
    %402 = vmatpush1.msra.mxu0 %v147
    %403 = vmatprep.subr.mxu0 0.0
    %404 = vmatpush1.msra.mxu0 %v146
    %405 = vmatprep.subr.mxu0 0.0
    %406 = vmatpush1.msra.mxu0 %v145
    %407 = vmatprep.subr.mxu0 0.0
    %408 = vmatpush1.msra.mxu0 %v144
    %409 = vmatprep.subr.mxu0 0.0
    %410 = vmatpush2.msra.mxu0 0.0
    %411 = vmatprep.subr.mxu0 0.0
    %412 = vmatpush2.msra.mxu0 0.0
    %413 = vmatprep.subr.mxu0 0.0
    %414 = vmatpush2.msra.mxu0 0.0
    %415 = vmatprep.subr.mxu0 0.0
    %416 = vmatpush2.msra.mxu0 0.0
    %417 = vmatprep.subr.mxu0 0.0
    %418 = vmatpush2.msra.mxu0 0.0
    %419 = vmatprep.subr.mxu0 0.0
    %420 = vmatpush2.msra.mxu0 0.0
    %421 = vmatprep.subr.mxu0 0.0
    %422 = vmatpush2.msra.mxu0 0.0
    %423 = vmatprep.subr.mxu0 0.0
    %424 = vmatpush2.msra.mxu0 0.0
    %425 = vmatprep.subr.mxu0 0.0
    %426 = vmatpush2.msra.mxu0 0.0
    %427 = vmatprep.subr.mxu0 0.0
    %428 = vmatpush2.msra.mxu0 0.0
    %429 = vmatprep.subr.mxu0 0.0
    %430 = vmatpush2.msra.mxu0 0.0
    %431 = vmatprep.subr.mxu0 0.0
    %432 = vmatpush2.msra.mxu0 0.0
    %433 = vmatprep.subr.mxu0 0.0
    %434 = vmatpush2.msra.mxu0 0.0
    %435 = vmatprep.subr.mxu0 0.0
    %436 = vmatpush2.msra.mxu0 0.0
    %437 = vmatprep.subr.mxu0 0.0
    %438 = vmatpush2.msra.mxu0 0.0
    %439 = vmatprep.subr.mxu0 0.0
    %440 = vmatpush2.msra.mxu0 0.0
    %441 = vmatprep.mubr.f32.mxu0 0.0
    %442 = vmatmul.mubr.f32.gmra.mxu0 %v47
    %v443 = vpop.f32.mrf.mxu0
    %v444 = vadd.f32 %v374, %v443
    %v445 = vpop.f32.mrf.mxu0
    %446 = vdwg.mxu0
    %447 = vst [vmem:[#allocation7] sm:$0xff] %v444
    // Predicated region
    $region22: #{tpu_custom_call.1} parent=1 // pred_check
      _
    $region23: #{tpu_custom_call.1} parent=1 // pred_check_branch
      %449 = sbr.rel (0) target = $region25
    $region24: #{tpu_custom_call.1} parent=1 // pred_region
      %s451 = ssub.s32 128, 128
      %452 = vsyncadd [#allocation4], %s451
      %s454 = sshll.u32 [#allocation7], 4
      %s455 = int_to_ptr.vmem [resolvable:$true] %s454
      %457 = dma.vmem_to_hbm [thread:$0]  %s455, 128, %s3, [#allocation4]
    $region25: #{tpu_custom_call.1} parent=1 // pred_fallthru
      _
    // Predicated region
    $region26: #{tpu_custom_call.1} parent=1 // pred_check
      _
    $region27: #{tpu_custom_call.1} parent=1 // pred_check_branch
      %459 = sbr.rel (0) target = $region29
    $region28: #{tpu_custom_call.1} parent=1 // pred_region
      %460 = dma.done [#allocation4], 128
    $region29: #{tpu_custom_call.1} parent=1 // pred_fallthru
      _
    %461 = vsyncpa [#allocation3], 1
    %462 = vsyncpa [#allocation6], 1
    %463 = vsyncpa [#allocation4], 1

</llo_original>
